<compile_context>
chip_gen: v7x
topology: tpu7x:2x2x1
jax: 0.10.0
libtpu: 0.0.40
codegen_flags: <defaults>
</compile_context>

<pallas_src>
import functools

import jax
import jax.numpy as jnp
from jax.experimental import pallas as pl
from jax.experimental.pallas import tpu as pltpu


def _round_up(x, m):
    return (x + m - 1) // m * m


# ----------------------------------------------------------------------------
# Pallas kernel: three (matmul -> bias -> ReLU) layers + sum over K with a
# paired (lane-dense) output. All BN scales are pre-folded into the weights.
# ----------------------------------------------------------------------------
def _feature_agg_kernel(k, h3,
                        x_ref, w1_ref, b1_ref, w2_ref, b2_ref, w3_ref, b3_ref,
                        out_ref):
    """
    x_ref:   (tile_pts*K, C+4)  packed [feature | diff_xyz | dist] rows
    w3_ref:  (H2, 2*H3) layer-3 weights duplicated along lanes ([W3 | W3])
    out_ref: (tile_pts//2, 2*H3): point 2q in lanes [0,H3), 2q+1 in [H3,2*H3)
    """
    x = x_ref[...]

    # layer 1 (fused: BN scale folded into W, dist column packed in input)
    h = jnp.dot(x, w1_ref[...], preferred_element_type=jnp.float32)
    h = jnp.maximum(h + b1_ref[...], 0.0)

    # layer 2
    h = jnp.dot(h.astype(w2_ref.dtype), w2_ref[...],
                preferred_element_type=jnp.float32)
    h = jnp.maximum(h + b2_ref[...], 0.0)

    # layer 3 — duplicated weights give a 128-lane output at the same MXU cost
    h = jnp.dot(h.astype(w3_ref.dtype), w3_ref[...],
                preferred_element_type=jnp.float32)
    h = jnp.maximum(h + b3_ref[...], 0.0)             # (R, 2*H3)

    # reduction='sum' over the K neighbour axis, two points per output row.
    r, w = h.shape                                     # r = tile_pts*K
    tile_half = r // (2 * k)
    h4 = h.reshape(tile_half, 2, k, w)                 # major-dim split (free)
    s0 = jnp.sum(h4[:, 0], axis=1)                     # (tile_half, 2*H3) even
    s1 = jnp.sum(h4[:, 1], axis=1)                     # (tile_half, 2*H3) odd
    lane = jax.lax.broadcasted_iota(jnp.int32, (tile_half, w), 1)
    out_ref[...] = jnp.where(lane < h3, s0, s1)


def feature_aggregation_pallas(src_xyz, tgt_xyz, feature, params, *,
                               tile_pts=512, compute_dtype=jnp.bfloat16):
    """
    Args (PyTorch layout):
        src_xyz:  (B, 3, N, K) float32
        tgt_xyz:  (B, 3, N)    float32
        feature:  (B, C, N, K) float32
        params:   dict with w1..w3 (Cin, Cout), s1..s3, b1..b3 (1, Cout)
    Returns:
        (B, out_channels, N) float32
    """
    b, c, n, k = feature.shape
    m = b * n

    # ---- pack [feature | diff | dist] into one lane-flat row stream ---------
    # (plain JAX; fuses into a single transpose/pack fusion before the kernel)
    diff = src_xyz - tgt_xyz[..., None]                          # (B,3,N,K)
    dist = jnp.sum(diff * diff, axis=1, keepdims=True)           # (B,1,N,K)
    x = jnp.concatenate([feature, diff, dist], axis=1)           # (B,C+4,N,K)
    x_rows = jnp.transpose(x, (0, 2, 3, 1)).reshape(m * k, c + 4)

    # ---- fold eval-mode BN scale into weights: (x@W)*s + b == x@(W*s) + b ---
    w1 = (params["w1"] * params["s1"]).astype(compute_dtype)     # (C+4, H1)
    w2 = (params["w2"] * params["s2"]).astype(compute_dtype)     # (H1,  H2)
    w3f = params["w3"] * params["s3"]                            # (H2,  H3)
    h1, h2, h3 = w1.shape[1], w2.shape[1], w3f.shape[1]
    # duplicate layer-3 weights/bias to 2*H3 lanes -> lane-dense paired output
    w3 = jnp.concatenate([w3f, w3f], axis=1).astype(compute_dtype)
    b1, b2 = params["b1"], params["b2"]
    b3 = jnp.concatenate([params["b3"], params["b3"]], axis=1)

    x_rows = x_rows.astype(compute_dtype)

    # ---- tiling: tile_pts points (tile_pts*K matmul rows) per grid step -----
    tile_pts = max(16, min(int(tile_pts), _round_up(m, 16)))
    tile_pts = _round_up(tile_pts, 16)
    # keep the grid >= 2 steps when possible so the "parallel" axis can shard
    # across both TensorCores on v7x (megacore)
    if m > 16 and _round_up(m, tile_pts) == tile_pts:
        tile_pts = _round_up(pl.cdiv(m, 2), 16)
    m_pad = _round_up(m, tile_pts)
    if m_pad != m:
        x_rows = jnp.pad(x_rows, ((0, (m_pad - m) * k), (0, 0)))
    grid = (m_pad // tile_pts,)

    rows = m_pad * k
    flops = 2 * rows * ((c + 4) * h1 + h1 * h2 + h2 * 2 * h3)
    bytes_accessed = (x_rows.size * x_rows.dtype.itemsize
                      + m_pad * h3 * 4
                      + (w1.size + w2.size + w3.size)
                      * jnp.dtype(compute_dtype).itemsize
                      + (b1.size + b2.size + b3.size) * 4)

    full = lambda i: (0, 0)  # noqa: E731   (weights/biases are not tiled)
    grid_spec = pltpu.PrefetchScalarGridSpec(
        num_scalar_prefetch=0,
        grid=grid,
        in_specs=[
            pl.BlockSpec((tile_pts * k, c + 4), lambda i: (i, 0)),
            pl.BlockSpec(w1.shape, full),
            pl.BlockSpec(b1.shape, full),
            pl.BlockSpec(w2.shape, full),
            pl.BlockSpec(b2.shape, full),
            pl.BlockSpec(w3.shape, full),
            pl.BlockSpec(b3.shape, full),
        ],
        out_specs=pl.BlockSpec((tile_pts // 2, 2 * h3), lambda i: (i, 0)),
    )

    kernel = functools.partial(_feature_agg_kernel, k, h3)
    out_pairs = pl.pallas_call(
        kernel,
        out_shape=jax.ShapeDtypeStruct((m_pad // 2, 2 * h3), jnp.float32),
        grid_spec=grid_spec,
        compiler_params=pltpu.CompilerParams(
            dimension_semantics=("parallel",),
            vmem_limit_bytes=48 * 1024 * 1024),
        cost_estimate=pl.CostEstimate(flops=int(flops), transcendentals=0,
                                      bytes_accessed=int(bytes_accessed)),
    )(x_rows, w1, b1, w2, b2, w3, b3)

    # un-pair (m_pad//2, 2*H3) -> (m_pad, H3), strip padding, back to (B, H, N)
    out_flat = out_pairs.reshape(m_pad, h3)[:m]
    return jnp.transpose(out_flat.reshape(b, n, h3), (0, 2, 1))


# ----------------------------------------------------------------------------
# Deterministic parameter construction (xavier_uniform for 1x1 convs,
# default BatchNorm stats expressed as scale/bias, eval mode).
# ----------------------------------------------------------------------------
def make_params(key, in_channels, mlp_channels=(64, 64, 64), use_relation=True,
                bn_eps=1e-5):
    cin = in_channels + (4 if use_relation else 0)
    dims = [cin] + list(mlp_channels)
    params = {}
    keys = jax.random.split(key, len(mlp_channels))
    for li, (d_in, d_out) in enumerate(zip(dims[:-1], dims[1:]), start=1):
        bound = (6.0 / (d_in + d_out)) ** 0.5          # xavier_uniform, 1x1 conv
        w = jax.random.uniform(keys[li - 1], (d_in, d_out), jnp.float32,
                               minval=-bound, maxval=bound)
        # BatchNorm2d defaults: gamma=1, beta=0, running_mean=0, running_var=1
        gamma = jnp.ones((d_out,), jnp.float32)
        beta = jnp.zeros((d_out,), jnp.float32)
        running_mean = jnp.zeros((d_out,), jnp.float32)
        running_var = jnp.ones((d_out,), jnp.float32)
        scale = gamma / jnp.sqrt(running_var + bn_eps)
        bias = beta - running_mean * scale
        params[f"w{li}"] = w
        params[f"s{li}"] = scale.reshape(1, d_out)
        params[f"b{li}"] = bias.reshape(1, d_out)
    return params


# ----------------------------------------------------------------------------
# Pure-JAX reference for correctness checking (unfolded BN).
# ----------------------------------------------------------------------------
def feature_aggregation_ref(src_xyz, tgt_xyz, feature, params):
    diff = src_xyz - tgt_xyz[..., None]                          # (B,3,N,K)
    dist = jnp.sum(diff * diff, axis=1, keepdims=True)           # (B,1,N,K)
    x = jnp.concatenate([feature, diff, dist], axis=1)           # (B,C+4,N,K)
    x = jnp.transpose(x, (0, 2, 3, 1))                           # (B,N,K,C+4)
    for li in (1, 2, 3):
        x = x @ params[f"w{li}"]
        x = jnp.maximum(x * params[f"s{li}"] + params[f"b{li}"], 0.0)
    x = jnp.sum(x, axis=2)                                       # (B,N,H)
    return jnp.transpose(x, (0, 2, 1))                           # (B,H,N)


if __name__ == "__main__":
    B, C, N, K = 2, 4, 16, 8
    key = jax.random.PRNGKey(0)
    k_src, k_tgt, k_feat, k_par = jax.random.split(key, 4)

    src_xyz = jax.random.normal(k_src, (B, 3, N, K), jnp.float32)
    tgt_xyz = jax.random.normal(k_tgt, (B, 3, N), jnp.float32)
    feature = jax.random.normal(k_feat, (B, C, N, K), jnp.float32)

    params = make_params(k_par, in_channels=C, mlp_channels=(64, 64, 64),
                         use_relation=True)

    ref = feature_aggregation_ref(src_xyz, tgt_xyz, feature, params)

    # f32 compute path — tight tolerance.
    run_f32 = jax.jit(functools.partial(feature_aggregation_pallas,
                                        compute_dtype=jnp.float32))
    out_f32 = jax.block_until_ready(run_f32(src_xyz, tgt_xyz, feature, params))
    assert out_f32.shape == (B, 64, N), out_f32.shape
    assert jnp.allclose(out_f32, ref, atol=1e-4, rtol=1e-4), \
        float(jnp.max(jnp.abs(out_f32 - ref)))

    # bf16 compute path (default; f32 MXU accumulation) — scale-relative check.
    run_bf16 = jax.jit(functools.partial(feature_aggregation_pallas,
                                         compute_dtype=jnp.bfloat16))
    out_bf16 = jax.block_until_ready(run_bf16(src_xyz, tgt_xyz, feature, params))
    assert out_bf16.shape == (B, 64, N), out_bf16.shape
    err = float(jnp.max(jnp.abs(out_bf16 - ref)))
    scale = float(jnp.max(jnp.abs(ref)))
    assert err <= 2e-2 * max(scale, 1.0), (err, scale)

    print("KERNEL_OK")
</pallas_src>

<mosaic_0001>
module attributes {stable_mosaic.version = 11 : i64} {
  func.func @_feature_agg_kernel(%arg0: i32, %arg1: memref<128x8xf32, #tpu.memory_space<vmem>>, %arg2: memref<8x64xf32, #tpu.memory_space<vmem>>, %arg3: memref<1x64xf32, #tpu.memory_space<vmem>>, %arg4: memref<64x64xf32, #tpu.memory_space<vmem>>, %arg5: memref<1x64xf32, #tpu.memory_space<vmem>>, %arg6: memref<64x128xf32, #tpu.memory_space<vmem>>, %arg7: memref<1x128xf32, #tpu.memory_space<vmem>>, %arg8: memref<8x128xf32, #tpu.memory_space<vmem>>) attributes {dimension_semantics = [#tpu.dimension_semantics<parallel>], iteration_bounds = array<i64: 2>, scalar_prefetch = 0 : i64, scratch_operands = 0 : i64, tpu.core_type = #tpu.core_type<tc>, window_params = [{transform_indices = @transform_0, window_bounds = array<i64: 128, 8>}, {pipeline_mode = #tpu.pipeline_mode<synchronous>, transform_indices = @transform_1, window_bounds = array<i64: 8, 64>}, {pipeline_mode = #tpu.pipeline_mode<synchronous>, transform_indices = @transform_2, window_bounds = array<i64: 1, 64>}, {pipeline_mode = #tpu.pipeline_mode<synchronous>, transform_indices = @transform_3, window_bounds = array<i64: 64, 64>}, {pipeline_mode = #tpu.pipeline_mode<synchronous>, transform_indices = @transform_4, window_bounds = array<i64: 1, 64>}, {pipeline_mode = #tpu.pipeline_mode<synchronous>, transform_indices = @transform_5, window_bounds = array<i64: 64, 128>}, {pipeline_mode = #tpu.pipeline_mode<synchronous>, transform_indices = @transform_6, window_bounds = array<i64: 1, 128>}, {transform_indices = @transform_7, window_bounds = array<i64: 8, 128>}]} {
    %c0 = arith.constant 0 : index
    %c0_0 = arith.constant 0 : index
    %0 = vector.load %arg1[%c0, %c0_0] : memref<128x8xf32, #tpu.memory_space<vmem>>, vector<128x8xf32>
    %c0_1 = arith.constant 0 : index
    %c0_2 = arith.constant 0 : index
    %1 = vector.load %arg2[%c0_1, %c0_2] : memref<8x64xf32, #tpu.memory_space<vmem>>, vector<8x64xf32>
    %cst = arith.constant dense<0.000000e+00> : vector<128x64xf32>
    %2 = tpu.matmul %0, %1, %cst {dimension_numbers = #tpu.dot_dimension_numbers<[1], [0], [0], [1], [0, 0, 1, 1], [], []>} : vector<128x8xf32>, vector<8x64xf32>, vector<128x64xf32> -> vector<128x64xf32>
    %c0_3 = arith.constant 0 : index
    %c0_4 = arith.constant 0 : index
    %3 = vector.load %arg3[%c0_3, %c0_4] : memref<1x64xf32, #tpu.memory_space<vmem>>, vector<1x64xf32>
    %4 = vector.broadcast %3 : vector<1x64xf32> to vector<128x64xf32>
    %5 = arith.addf %2, %4 : vector<128x64xf32>
    %cst_5 = arith.constant 0.000000e+00 : f32
    %6 = vector.broadcast %cst_5 : f32 to vector<128x64xf32>
    %7 = arith.maximumf %5, %6 : vector<128x64xf32>
    %c0_6 = arith.constant 0 : index
    %c0_7 = arith.constant 0 : index
    %8 = vector.load %arg4[%c0_6, %c0_7] : memref<64x64xf32, #tpu.memory_space<vmem>>, vector<64x64xf32>
    %cst_8 = arith.constant dense<0.000000e+00> : vector<128x64xf32>
    %9 = tpu.matmul %7, %8, %cst_8 {dimension_numbers = #tpu.dot_dimension_numbers<[1], [0], [0], [1], [0, 0, 1, 1], [], []>} : vector<128x64xf32>, vector<64x64xf32>, vector<128x64xf32> -> vector<128x64xf32>
    %c0_9 = arith.constant 0 : index
    %c0_10 = arith.constant 0 : index
    %10 = vector.load %arg5[%c0_9, %c0_10] : memref<1x64xf32, #tpu.memory_space<vmem>>, vector<1x64xf32>
    %11 = vector.broadcast %10 : vector<1x64xf32> to vector<128x64xf32>
    %12 = arith.addf %9, %11 : vector<128x64xf32>
    %cst_11 = arith.constant 0.000000e+00 : f32
    %13 = vector.broadcast %cst_11 : f32 to vector<128x64xf32>
    %14 = arith.maximumf %12, %13 : vector<128x64xf32>
    %c0_12 = arith.constant 0 : index
    %c0_13 = arith.constant 0 : index
    %15 = vector.load %arg6[%c0_12, %c0_13] : memref<64x128xf32, #tpu.memory_space<vmem>>, vector<64x128xf32>
    %cst_14 = arith.constant dense<0.000000e+00> : vector<128x128xf32>
    %16 = tpu.matmul %14, %15, %cst_14 {dimension_numbers = #tpu.dot_dimension_numbers<[1], [0], [0], [1], [0, 0, 1, 1], [], []>} : vector<128x64xf32>, vector<64x128xf32>, vector<128x128xf32> -> vector<128x128xf32>
    %c0_15 = arith.constant 0 : index
    %c0_16 = arith.constant 0 : index
    %17 = vector.load %arg7[%c0_15, %c0_16] : memref<1x128xf32, #tpu.memory_space<vmem>>, vector<1x128xf32>
    %18 = vector.broadcast %17 : vector<1x128xf32> to vector<128x128xf32>
    %19 = arith.addf %16, %18 : vector<128x128xf32>
    %cst_17 = arith.constant 0.000000e+00 : f32
    %20 = vector.broadcast %cst_17 : f32 to vector<128x128xf32>
    %21 = arith.maximumf %19, %20 : vector<128x128xf32>
    %22 = vector.shape_cast %21 : vector<128x128xf32> to vector<8x2x8x128xf32>
    %23 = vector.extract_strided_slice %22 {offsets = [0, 0, 0, 0], sizes = [8, 1, 8, 128], strides = [1, 1, 1, 1]} : vector<8x2x8x128xf32> to vector<8x1x8x128xf32>
    %24 = vector.shape_cast %23 : vector<8x1x8x128xf32> to vector<8x8x128xf32>
    %cst_18 = arith.constant dense<0.000000e+00> : vector<8x128xf32>
    %25 = vector.multi_reduction <add>, %24, %cst_18 [1] : vector<8x8x128xf32> to vector<8x128xf32>
    %26 = vector.extract_strided_slice %22 {offsets = [0, 1, 0, 0], sizes = [8, 1, 8, 128], strides = [1, 1, 1, 1]} : vector<8x2x8x128xf32> to vector<8x1x8x128xf32>
    %27 = vector.shape_cast %26 : vector<8x1x8x128xf32> to vector<8x8x128xf32>
    %cst_19 = arith.constant dense<0.000000e+00> : vector<8x128xf32>
    %28 = vector.multi_reduction <add>, %27, %cst_19 [1] : vector<8x8x128xf32> to vector<8x128xf32>
    %29 = tpu.iota {dimensions = array<i32: 1>} : vector<8x128xi32>
    %c64_i32 = arith.constant 64 : i32
    %30 = vector.broadcast %c64_i32 : i32 to vector<8x128xi32>
    %31 = arith.cmpi slt, %29, %30 : vector<8x128xi32>
    %32 = arith.select %31, %25, %28 : vector<8x128xi1>, vector<8x128xf32>
    %c0_20 = arith.constant 0 : index
    %c0_21 = arith.constant 0 : index
    %33 = vector.load %arg8[%c0_20, %c0_21] : memref<8x128xf32, #tpu.memory_space<vmem>>, vector<8x128xf32>
    tpu.vector_store %arg8[%c0_20, %c0_21], %32 {strides = array<i32>} : memref<8x128xf32, #tpu.memory_space<vmem>>, vector<8x128xf32>,
    return
  }
  func.func @transform_0(%arg0: i32) -> (i32, i32) {
    %c0_i32 = arith.constant 0 : i32
    %c0_i32_0 = arith.constant 0 : i32
    return %arg0, %c0_i32 : i32, i32
  }
  func.func @transform_1(%arg0: i32) -> (i32, i32) {
    %c0_i32 = arith.constant 0 : i32
    %c0_i32_0 = arith.constant 0 : i32
    %c0_i32_1 = arith.constant 0 : i32
    return %c0_i32, %c0_i32_0 : i32, i32
  }
  func.func @transform_2(%arg0: i32) -> (i32, i32) {
    %c0_i32 = arith.constant 0 : i32
    %c0_i32_0 = arith.constant 0 : i32
    %c0_i32_1 = arith.constant 0 : i32
    return %c0_i32, %c0_i32_0 : i32, i32
  }
  func.func @transform_3(%arg0: i32) -> (i32, i32) {
    %c0_i32 = arith.constant 0 : i32
    %c0_i32_0 = arith.constant 0 : i32
    %c0_i32_1 = arith.constant 0 : i32
    return %c0_i32, %c0_i32_0 : i32, i32
  }
  func.func @transform_4(%arg0: i32) -> (i32, i32) {
    %c0_i32 = arith.constant 0 : i32
    %c0_i32_0 = arith.constant 0 : i32
    %c0_i32_1 = arith.constant 0 : i32
    return %c0_i32, %c0_i32_0 : i32, i32
  }
  func.func @transform_5(%arg0: i32) -> (i32, i32) {
    %c0_i32 = arith.constant 0 : i32
    %c0_i32_0 = arith.constant 0 : i32
    %c0_i32_1 = arith.constant 0 : i32
    return %c0_i32, %c0_i32_0 : i32, i32
  }
  func.func @transform_6(%arg0: i32) -> (i32, i32) {
    %c0_i32 = arith.constant 0 : i32
    %c0_i32_0 = arith.constant 0 : i32
    %c0_i32_1 = arith.constant 0 : i32
    return %c0_i32, %c0_i32_0 : i32, i32
  }
  func.func @transform_7(%arg0: i32) -> (i32, i32) {
    %c0_i32 = arith.constant 0 : i32
    %c0_i32_0 = arith.constant 0 : i32
    return %arg0, %c0_i32 : i32, i32
  }
}

</mosaic_0001>

<llo_original>
// kernel: feature_aggregation_pallas.1
$region0: #{feature_aggregation_pallas.1}
  #allocation0 [shape = 'u32[]', space=smem, size = 0x4, offset = 0x4, fixed_abs, tag = 'smem constant byte address 0x4 - core index']
  #allocation1 [shape = 'u32[144,128]{1,0:T(1,128)}', space=vmem, size = 0x12000, scoped, tag = 'internal scratch']
  %s0 = inlined_call_operand.vmem [shape: f32[256,8], index: 0, kind: input, shape index: {}]
  %s1 = inlined_call_operand.vmem [shape: f32[8,64], index: 1, kind: input, shape index: {}]
  %s2 = inlined_call_operand.vmem [shape: f32[1,64], index: 2, kind: input, shape index: {}]
  %s3 = inlined_call_operand.vmem [shape: f32[64,64], index: 3, kind: input, shape index: {}]
  %s4 = inlined_call_operand.vmem [shape: f32[1,64], index: 4, kind: input, shape index: {}]
  %s5 = inlined_call_operand.vmem [shape: f32[64,128], index: 5, kind: input, shape index: {}]
  %s6 = inlined_call_operand.vmem [shape: f32[1,128], index: 6, kind: input, shape index: {}]
  %s7 = inlined_call_operand.vmem [shape: f32[16,128], index: 7, kind: output, shape index: {}]
  %s8 = sld [smem:[#allocation0]]
  $region61: #{feature_aggregation_pallas.1} parent=0
    _
  %s10 = ssub.s32 1, %s8
  %s11 = scalar_select 0, %s10, %s8
  loop: start=0, step=1, limit=4
  $region2: #{feature_aggregation_pallas.1} parent=0 // loop_pre_header
    _
  $region3: #{feature_aggregation_pallas.1} parent=0 // loop_header
    %s13 = sphi 0, %s17
    %p14 = scmp.ge.s32.totalorder %s13, 4
    %s23 = sphi 0, %s25
    %s26 = sphi 0, %s23
    %s27 = sphi 0, %s26
    %s43 = sphi 0, %s27
    %s47 = sphi 0, %s47
    %s49 = sphi 0, %s47
    %s50 = sphi 0, %s49
    %s64 = sphi 0, %s50
    %s68 = sphi 0, %s68
    %s70 = sphi 0, %s68
    %s71 = sphi 0, %s70
    %s85 = sphi 0, %s71
    %s89 = sphi 0, %s89
    %s91 = sphi 0, %s89
    %s92 = sphi 0, %s91
    %s106 = sphi 0, %s92
    %s110 = sphi 0, %s110
    %s112 = sphi 0, %s110
    %s113 = sphi 0, %s112
    %s127 = sphi 0, %s113
    %s131 = sphi 0, %s131
    %s133 = sphi 0, %s131
    %s134 = sphi 0, %s133
    %s148 = sphi 0, %s134
    %s152 = sphi 0, %s152
    %s154 = sphi 0, %s152
    %s155 = sphi 0, %s154
    %s169 = sphi 0, %s155
    %s175 = sphi 0, %s177
    %s178 = sphi 0, %s175
    %s179 = sphi 0, %s178
    %s195 = sphi 0, %s179
  $region4: #{feature_aggregation_pallas.1} parent=0 // loop_header_branch
    %16 = sbr.rel (%p14) target = $region8
  $region5: #{feature_aggregation_pallas.1} parent=0 // loop_body
    %s18 = ssub.s32 %s13, 1
    %s19 = ssub.s32 %s13, 2
    %s20 = sadd.s32 %s13, 1
    %s21 = ssub.s32 %s13, %s20
    %p22 = scmp.eq.s32.totalorder %s21, 0
    %s24 = sadd.s32 %s23, 1
    %s25 = scalar_select %p22, %s23, %s24
    %p28 = pneg %p22
    %p29 = scmp.eq.s32.totalorder %s13, 1
    %p30 = por %p28, %p29
    %p31 = scmp.ne.s32.totalorder %s23, %s26
    %p32 = scmp.eq.s32.totalorder %s13, 0
    %p33 = por %p31, %p32
    %p34 = scmp.ne.s32.totalorder %s23, %s26
    %p35 = scmp.eq.s32.totalorder %s18, 1
    %p36 = por %p34, %p35
    %p37 = scmp.ne.s32.totalorder %s26, %s27
    %p38 = scmp.eq.s32.totalorder %s18, 0
    %p39 = por %p37, %p38
    %p40 = scmp.ne.s32.totalorder %s26, %s27
    %p41 = scmp.eq.s32.totalorder %s19, 1
    %p42 = por %p40, %p41
    %p44 = scmp.ne.s32.totalorder %s27, %s43
    %p45 = scmp.eq.s32.totalorder %s19, 0
    %p46 = por %p44, %p45
    %s48 = sadd.s32 %s47, 1
    %p51 = scmp.eq.s32.totalorder %s13, 1
    %p52 = scmp.ne.s32.totalorder %s47, %s49
    %p53 = scmp.eq.s32.totalorder %s13, 0
    %p54 = por %p52, %p53
    %p55 = scmp.ne.s32.totalorder %s47, %s49
    %p56 = scmp.eq.s32.totalorder %s18, 1
    %p57 = por %p55, %p56
    %p58 = scmp.ne.s32.totalorder %s49, %s50
    %p59 = scmp.eq.s32.totalorder %s18, 0
    %p60 = por %p58, %p59
    %p61 = scmp.ne.s32.totalorder %s49, %s50
    %p62 = scmp.eq.s32.totalorder %s19, 1
    %p63 = por %p61, %p62
    %p65 = scmp.ne.s32.totalorder %s50, %s64
    %p66 = scmp.eq.s32.totalorder %s19, 0
    %p67 = por %p65, %p66
    %s69 = sadd.s32 %s68, 1
    %p72 = scmp.eq.s32.totalorder %s13, 1
    %p73 = scmp.ne.s32.totalorder %s68, %s70
    %p74 = scmp.eq.s32.totalorder %s13, 0
    %p75 = por %p73, %p74
    %p76 = scmp.ne.s32.totalorder %s68, %s70
    %p77 = scmp.eq.s32.totalorder %s18, 1
    %p78 = por %p76, %p77
    %p79 = scmp.ne.s32.totalorder %s70, %s71
    %p80 = scmp.eq.s32.totalorder %s18, 0
    %p81 = por %p79, %p80
    %p82 = scmp.ne.s32.totalorder %s70, %s71
    %p83 = scmp.eq.s32.totalorder %s19, 1
    %p84 = por %p82, %p83
    %p86 = scmp.ne.s32.totalorder %s71, %s85
    %p87 = scmp.eq.s32.totalorder %s19, 0
    %p88 = por %p86, %p87
    %s90 = sadd.s32 %s89, 1
    %p93 = scmp.eq.s32.totalorder %s13, 1
    %p94 = scmp.ne.s32.totalorder %s89, %s91
    %p95 = scmp.eq.s32.totalorder %s13, 0
    %p96 = por %p94, %p95
    %p97 = scmp.ne.s32.totalorder %s89, %s91
    %p98 = scmp.eq.s32.totalorder %s18, 1
    %p99 = por %p97, %p98
    %p100 = scmp.ne.s32.totalorder %s91, %s92
    %p101 = scmp.eq.s32.totalorder %s18, 0
    %p102 = por %p100, %p101
    %p103 = scmp.ne.s32.totalorder %s91, %s92
    %p104 = scmp.eq.s32.totalorder %s19, 1
    %p105 = por %p103, %p104
    %p107 = scmp.ne.s32.totalorder %s92, %s106
    %p108 = scmp.eq.s32.totalorder %s19, 0
    %p109 = por %p107, %p108
    %s111 = sadd.s32 %s110, 1
    %p114 = scmp.eq.s32.totalorder %s13, 1
    %p115 = scmp.ne.s32.totalorder %s110, %s112
    %p116 = scmp.eq.s32.totalorder %s13, 0
    %p117 = por %p115, %p116
    %p118 = scmp.ne.s32.totalorder %s110, %s112
    %p119 = scmp.eq.s32.totalorder %s18, 1
    %p120 = por %p118, %p119
    %p121 = scmp.ne.s32.totalorder %s112, %s113
    %p122 = scmp.eq.s32.totalorder %s18, 0
    %p123 = por %p121, %p122
    %p124 = scmp.ne.s32.totalorder %s112, %s113
    %p125 = scmp.eq.s32.totalorder %s19, 1
    %p126 = por %p124, %p125
    %p128 = scmp.ne.s32.totalorder %s113, %s127
    %p129 = scmp.eq.s32.totalorder %s19, 0
    %p130 = por %p128, %p129
    %s132 = sadd.s32 %s131, 1
    %p135 = scmp.eq.s32.totalorder %s13, 1
    %p136 = scmp.ne.s32.totalorder %s131, %s133
    %p137 = scmp.eq.s32.totalorder %s13, 0
    %p138 = por %p136, %p137
    %p139 = scmp.ne.s32.totalorder %s131, %s133
    %p140 = scmp.eq.s32.totalorder %s18, 1
    %p141 = por %p139, %p140
    %p142 = scmp.ne.s32.totalorder %s133, %s134
    %p143 = scmp.eq.s32.totalorder %s18, 0
    %p144 = por %p142, %p143
    %p145 = scmp.ne.s32.totalorder %s133, %s134
    %p146 = scmp.eq.s32.totalorder %s19, 1
    %p147 = por %p145, %p146
    %p149 = scmp.ne.s32.totalorder %s134, %s148
    %p150 = scmp.eq.s32.totalorder %s19, 0
    %p151 = por %p149, %p150
    %s153 = sadd.s32 %s152, 1
    %p156 = scmp.eq.s32.totalorder %s13, 1
    %p157 = scmp.ne.s32.totalorder %s152, %s154
    %p158 = scmp.eq.s32.totalorder %s13, 0
    %p159 = por %p157, %p158
    %p160 = scmp.ne.s32.totalorder %s152, %s154
    %p161 = scmp.eq.s32.totalorder %s18, 1
    %p162 = por %p160, %p161
    %p163 = scmp.ne.s32.totalorder %s154, %s155
    %p164 = scmp.eq.s32.totalorder %s18, 0
    %p165 = por %p163, %p164
    %p166 = scmp.ne.s32.totalorder %s154, %s155
    %p167 = scmp.eq.s32.totalorder %s19, 1
    %p168 = por %p166, %p167
    %p170 = scmp.ne.s32.totalorder %s155, %s169
    %p171 = scmp.eq.s32.totalorder %s19, 0
    %p172 = por %p170, %p171
    %s173 = ssub.s32 %s13, %s20
    %p174 = scmp.eq.s32.totalorder %s173, 0
    %s176 = sadd.s32 %s175, 1
    %s177 = scalar_select %p174, %s175, %s176
    %p180 = pneg %p174
    %p181 = scmp.eq.s32.totalorder %s13, 1
    %p182 = por %p180, %p181
    %p183 = scmp.ne.s32.totalorder %s175, %s178
    %p184 = scmp.eq.s32.totalorder %s13, 0
    %p185 = por %p183, %p184
    %p186 = scmp.ne.s32.totalorder %s175, %s178
    %p187 = scmp.eq.s32.totalorder %s18, 1
    %p188 = por %p186, %p187
    %p189 = scmp.ne.s32.totalorder %s178, %s179
    %p190 = scmp.eq.s32.totalorder %s18, 0
    %p191 = por %p189, %p190
    %p192 = scmp.ne.s32.totalorder %s178, %s179
    %p193 = scmp.eq.s32.totalorder %s19, 1
    %p194 = por %p192, %p193
    %p196 = scmp.ne.s32.totalorder %s179, %s195
    %p197 = scmp.eq.s32.totalorder %s19, 0
    %p198 = por %p196, %p197
    %p199 = scmp.le.s32.totalorder 1, %s13
    %p200 = scmp.lt.s32.totalorder %s13, 3
    %p201 = pnand %p199, %p200
    %p202 = pneg %p201
    // Predicated region
    $region9: #{feature_aggregation_pallas.1} parent=5 // pred_check
      _
    $region10: #{feature_aggregation_pallas.1} parent=5 // pred_check_branch
      %204 = sbr.rel (%p201) target = $region12
    $region11: #{feature_aggregation_pallas.1} parent=5 // pred_region
      %s205 = ssub.s32 %s13, 1
      // Predicated region
      $region13: #{feature_aggregation_pallas.1} parent=11 // pred_check
        %p206 = pneg %p60
      $region14: #{feature_aggregation_pallas.1} parent=11 // pred_check_branch
        %208 = sbr.rel (%p206) target = $region16
      $region15: #{feature_aggregation_pallas.1} parent=11 // pred_region
        _
      $region16: #{feature_aggregation_pallas.1} parent=11 // pred_fallthru
        _
      // Predicated region
      $region17: #{feature_aggregation_pallas.1} parent=11 // pred_check
        %p209 = pneg %p81
      $region18: #{feature_aggregation_pallas.1} parent=11 // pred_check_branch
        %211 = sbr.rel (%p209) target = $region20
      $region19: #{feature_aggregation_pallas.1} parent=11 // pred_region
        _
      $region20: #{feature_aggregation_pallas.1} parent=11 // pred_fallthru
        _
      // Predicated region
      $region21: #{feature_aggregation_pallas.1} parent=11 // pred_check
        %p212 = pneg %p102
      $region22: #{feature_aggregation_pallas.1} parent=11 // pred_check_branch
        %214 = sbr.rel (%p212) target = $region24
      $region23: #{feature_aggregation_pallas.1} parent=11 // pred_region
        _
      $region24: #{feature_aggregation_pallas.1} parent=11 // pred_fallthru
        _
      // Predicated region
      $region25: #{feature_aggregation_pallas.1} parent=11 // pred_check
        %p215 = pneg %p123
      $region26: #{feature_aggregation_pallas.1} parent=11 // pred_check_branch
        %217 = sbr.rel (%p215) target = $region28
      $region27: #{feature_aggregation_pallas.1} parent=11 // pred_region
        _
      $region28: #{feature_aggregation_pallas.1} parent=11 // pred_fallthru
        _
      // Predicated region
      $region29: #{feature_aggregation_pallas.1} parent=11 // pred_check
        %p218 = pneg %p144
      $region30: #{feature_aggregation_pallas.1} parent=11 // pred_check_branch
        %220 = sbr.rel (%p218) target = $region32
      $region31: #{feature_aggregation_pallas.1} parent=11 // pred_region
        _
      $region32: #{feature_aggregation_pallas.1} parent=11 // pred_fallthru
        _
      // Predicated region
      $region33: #{feature_aggregation_pallas.1} parent=11 // pred_check
        %p221 = pneg %p165
      $region34: #{feature_aggregation_pallas.1} parent=11 // pred_check_branch
        %223 = sbr.rel (%p221) target = $region36
      $region35: #{feature_aggregation_pallas.1} parent=11 // pred_region
        _
      $region36: #{feature_aggregation_pallas.1} parent=11 // pred_fallthru
        _
    $region12: #{feature_aggregation_pallas.1} parent=5 // pred_fallthru
      _
    %p224 = scmp.lt.s32.totalorder %s13, 2
    // Predicated region
    $region37: #{feature_aggregation_pallas.1} parent=5 // pred_check
      %p225 = pneg %p224
    $region38: #{feature_aggregation_pallas.1} parent=5 // pred_check_branch
      %227 = sbr.rel (%p225) target = $region40
    $region39: #{feature_aggregation_pallas.1} parent=5 // pred_region
      // Predicated region
      $region41: #{feature_aggregation_pallas.1} parent=39 // pred_check
        %p228 = pneg %p33
      $region42: #{feature_aggregation_pallas.1} parent=39 // pred_check_branch
        %230 = sbr.rel (%p228) target = $region44
      $region43: #{feature_aggregation_pallas.1} parent=39 // pred_region
        %s231 = smul.u32 16, %s13
        %p232 = scmp.lt.s32.totalorder %s231, 31
        %s233 = scalar_select %p232, %s231, 31
        %s234 = smul.addr %s233, 8
        %s235 = scalar_lea.vmem %s0, %s234
        %s236 = smul.u32 16, %s13
      $region44: #{feature_aggregation_pallas.1} parent=39 // pred_fallthru
        _
    $region40: #{feature_aggregation_pallas.1} parent=5 // pred_fallthru
      _
    %p237 = scmp.le.s32.totalorder 1, %s13
    %p238 = scmp.lt.s32.totalorder %s13, 3
    %p239 = pnand %p237, %p238
    %p240 = pneg %p239
    // Predicated region
    $region45: #{feature_aggregation_pallas.1} parent=5 // pred_check
      _
    $region46: #{feature_aggregation_pallas.1} parent=5 // pred_check_branch
      %242 = sbr.rel (%p239) target = $region48
    $region47: #{feature_aggregation_pallas.1} parent=5 // pred_region
      %s243 = ssub.s32 %s13, 1
      %s244 = smul.u32 16, %s18
      %p245 = scmp.lt.s32.totalorder %s244, 31
      %s246 = scalar_select %p245, %s244, 31
      %s247 = smul.addr %s246, 8
      %s248 = scalar_lea.vmem %s0, %s247
      %p249 = pneg %p39
      %p250 = pneg %p36
      %p251 = pneg %p60
      %p252 = pneg %p57
      %p253 = pneg %p81
      %p254 = pneg %p78
      %p255 = pneg %p102
      %p256 = pneg %p99
      %p257 = pneg %p123
      %p258 = pneg %p120
      %p259 = pneg %p144
      %p260 = pneg %p141
      %p261 = pneg %p165
      %p262 = pneg %p162
      %p263 = pneg %p191
      %p264 = pneg %p188
      %p265 = scmp.lt.s32.totalorder %s18, 1
      %s266 = scalar_select %p265, %s18, 1
      %s267 = smul.addr %s266, 8
      %s268 = scalar_lea.vmem %s7, %s267
      %s269 = smul.u32 16, %s18
      %p270 = scmp.lt.s32.totalorder %s269, 31
      %s271 = scalar_select %p270, %s269, 31
      %s272 = smul.addr %s271, 8
      %s273 = scalar_lea.vmem %s0, %s272
      %s274 = smul.u32 16, %s18
      %p275 = scmp.lt.s32.totalorder %s18, 1
      %s276 = scalar_select %p275, %s18, 1
      %s277 = smul.addr %s276, 8
      %s278 = scalar_lea.vmem %s7, %s277
      %v279 = vld [vmem:[%s273] sm:$0xff]
      %v280 = vld [vmem:[%s273 + $0x8] sm:$0xff]
      %v281 = vld [vmem:[%s273 + $0x10] sm:$0xff]
      %v282 = vld [vmem:[%s273 + $0x18] sm:$0xff]
      %v283 = vld [vmem:[%s273 + $0x20] sm:$0xff]
      %v284 = vld [vmem:[%s273 + $0x28] sm:$0xff]
      %v285 = vld [vmem:[%s273 + $0x30] sm:$0xff]
      %v286 = vld [vmem:[%s273 + $0x38] sm:$0xff]
      %v287 = vld [vmem:[%s273 + $0x40] sm:$0xff]
      %v288 = vld [vmem:[%s273 + $0x48] sm:$0xff]
      %v289 = vld [vmem:[%s273 + $0x50] sm:$0xff]
      %v290 = vld [vmem:[%s273 + $0x58] sm:$0xff]
      %v291 = vld [vmem:[%s273 + $0x60] sm:$0xff]
      %v292 = vld [vmem:[%s273 + $0x68] sm:$0xff]
      %v293 = vld [vmem:[%s273 + $0x70] sm:$0xff]
      %v294 = vld [vmem:[%s273 + $0x78] sm:$0xff]
      %v295 = vld [vmem:[%s1] sm:$0xff]
      %v296 = vld [vmem:[%s2] sm:$0x1]
      %v298 = vlaneseq
      %v299 = vshrl.u32 %v298, 7
      %v300 = vsub.s32 0, %v299
      %v301 = vrot.slane %v296, %v300
      %vm303 = vcmask 64512
      %v305 = vsel %vm303, %v279, 0
      %v308 = vsel %vm303, %v280, 0
      %v311 = vsel %vm303, %v281, 0
      %v314 = vsel %vm303, %v282, 0
      %v317 = vsel %vm303, %v283, 0
      %v320 = vsel %vm303, %v284, 0
      %v323 = vsel %vm303, %v285, 0
      %v326 = vsel %vm303, %v286, 0
      %v329 = vsel %vm303, %v287, 0
      %v332 = vsel %vm303, %v288, 0
      %v335 = vsel %vm303, %v289, 0
      %v338 = vsel %vm303, %v290, 0
      %v341 = vsel %vm303, %v291, 0
      %v344 = vsel %vm303, %v292, 0
      %v347 = vsel %vm303, %v293, 0
      %v350 = vsel %vm303, %v294, 0
      %352 = vmatprep.subr.mxu0 0.0
      %353 = vmatpush1.msra.mxu0 %v295
      %354 = vmatprep.subr.mxu0 0.0
      %355 = vmatpush1.msra.mxu0 0.0
      %356 = vmatprep.subr.mxu0 0.0
      %357 = vmatpush1.msra.mxu0 0.0
      %358 = vmatprep.subr.mxu0 0.0
      %359 = vmatpush1.msra.mxu0 0.0
      %360 = vmatprep.subr.mxu0 0.0
      %361 = vmatpush1.msra.mxu0 0.0
      %362 = vmatprep.subr.mxu0 0.0
      %363 = vmatpush1.msra.mxu0 0.0
      %364 = vmatprep.subr.mxu0 0.0
      %365 = vmatpush1.msra.mxu0 0.0
      %366 = vmatprep.subr.mxu0 0.0
      %367 = vmatpush1.msra.mxu0 0.0
      %368 = vmatprep.subr.mxu0 0.0
      %369 = vmatpush1.msra.mxu0 0.0
      %370 = vmatprep.subr.mxu0 0.0
      %371 = vmatpush1.msra.mxu0 0.0
      %372 = vmatprep.subr.mxu0 0.0
      %373 = vmatpush1.msra.mxu0 0.0
      %374 = vmatprep.subr.mxu0 0.0
      %375 = vmatpush1.msra.mxu0 0.0
      %376 = vmatprep.subr.mxu0 0.0
      %377 = vmatpush1.msra.mxu0 0.0
      %378 = vmatprep.subr.mxu0 0.0
      %379 = vmatpush1.msra.mxu0 0.0
      %380 = vmatprep.subr.mxu0 0.0
      %381 = vmatpush1.msra.mxu0 0.0
      %382 = vmatprep.subr.mxu0 0.0
      %383 = vmatpush1.msra.mxu0 0.0
      %384 = vmatprep.subr.mxu0 0.0
      %385 = vmatpush1.msra.mxu0 0.0
      %386 = vmatprep.subr.mxu0 0.0
      %387 = vmatpush1.msra.mxu0 0.0
      %388 = vmatprep.subr.mxu0 0.0
      %389 = vmatpush1.msra.mxu0 0.0
      %390 = vmatprep.subr.mxu0 0.0
      %391 = vmatpush1.msra.mxu0 0.0
      %392 = vmatprep.subr.mxu0 0.0
      %393 = vmatpush1.msra.mxu0 0.0
      %394 = vmatprep.subr.mxu0 0.0
      %395 = vmatpush1.msra.mxu0 0.0
      %396 = vmatprep.subr.mxu0 0.0
      %397 = vmatpush1.msra.mxu0 0.0
      %398 = vmatprep.subr.mxu0 0.0
      %399 = vmatpush1.msra.mxu0 0.0
      %400 = vmatprep.subr.mxu0 0.0
      %401 = vmatpush1.msra.mxu0 0.0
      %402 = vmatprep.subr.mxu0 0.0
      %403 = vmatpush1.msra.mxu0 0.0
      %404 = vmatprep.subr.mxu0 0.0
      %405 = vmatpush1.msra.mxu0 0.0
      %406 = vmatprep.subr.mxu0 0.0
      %407 = vmatpush1.msra.mxu0 0.0
      %408 = vmatprep.subr.mxu0 0.0
      %409 = vmatpush1.msra.mxu0 0.0
      %410 = vmatprep.subr.mxu0 0.0
      %411 = vmatpush1.msra.mxu0 0.0
      %412 = vmatprep.subr.mxu0 0.0
      %413 = vmatpush1.msra.mxu0 0.0
      %414 = vmatprep.subr.mxu0 0.0
      %415 = vmatpush1.msra.mxu0 0.0
      %416 = vmatprep.mubr.f32.mxu0 0.0
      %417 = vmatmul.mubr.f32.gmra.mrb[0].mxu0 %v305
      %v418 = vpop.f32.mrb[0].mxu0
      %v419 = vadd.f32 %v301, %v418
      %v420 = vpop.f32.mrb[0].mxu0
      %421 = vmatprep.mubr.f32.mxu0 0.0
      %422 = vmatmul.mubr.f32.gmra.mrb[0].mxu0 %v308
      %v423 = vpop.f32.mrb[0].mxu0
      %v424 = vadd.f32 %v301, %v423
      %v425 = vpop.f32.mrb[0].mxu0
      %426 = vmatprep.mubr.f32.mxu0 0.0
      %427 = vmatmul.mubr.f32.gmra.mrb[0].mxu0 %v311
      %v428 = vpop.f32.mrb[0].mxu0
      %v429 = vadd.f32 %v301, %v428
      %v430 = vpop.f32.mrb[0].mxu0
      %431 = vmatprep.mubr.f32.mxu0 0.0
      %432 = vmatmul.mubr.f32.gmra.mrb[0].mxu0 %v314
      %v433 = vpop.f32.mrb[0].mxu0
      %v434 = vadd.f32 %v301, %v433
      %v435 = vpop.f32.mrb[0].mxu0
      %436 = vmatprep.mubr.f32.mxu0 0.0
      %437 = vmatmul.mubr.f32.gmra.mrb[0].mxu0 %v317
      %v438 = vpop.f32.mrb[0].mxu0
      %v439 = vadd.f32 %v301, %v438
      %v440 = vpop.f32.mrb[0].mxu0
      %441 = vmatprep.mubr.f32.mxu0 0.0
      %442 = vmatmul.mubr.f32.gmra.mrb[0].mxu0 %v320
      %v443 = vpop.f32.mrb[0].mxu0
      %v444 = vadd.f32 %v301, %v443
      %v445 = vpop.f32.mrb[0].mxu0
      %446 = vmatprep.mubr.f32.mxu0 0.0
      %447 = vmatmul.mubr.f32.gmra.mrb[0].mxu0 %v323
      %v448 = vpop.f32.mrb[0].mxu0
      %v449 = vadd.f32 %v301, %v448
      %v450 = vpop.f32.mrb[0].mxu0
      %451 = vmatprep.mubr.f32.mxu0 0.0
      %452 = vmatmul.mubr.f32.gmra.mrb[0].mxu0 %v326
      %v453 = vpop.f32.mrb[0].mxu0
      %v454 = vadd.f32 %v301, %v453
      %v455 = vpop.f32.mrb[0].mxu0
      %456 = vmatprep.mubr.f32.mxu0 0.0
      %457 = vmatmul.mubr.f32.gmra.mrb[0].mxu0 %v329
      %v458 = vpop.f32.mrb[0].mxu0
      %v459 = vadd.f32 %v301, %v458
      %v460 = vpop.f32.mrb[0].mxu0
      %461 = vmatprep.mubr.f32.mxu0 0.0
      %462 = vmatmul.mubr.f32.gmra.mrb[0].mxu0 %v332
      %v463 = vpop.f32.mrb[0].mxu0
      %v464 = vadd.f32 %v301, %v463
      %v465 = vpop.f32.mrb[0].mxu0
      %466 = vmatprep.mubr.f32.mxu0 0.0
      %467 = vmatmul.mubr.f32.gmra.mrb[0].mxu0 %v335
      %v468 = vpop.f32.mrb[0].mxu0
      %v469 = vadd.f32 %v301, %v468
      %v470 = vpop.f32.mrb[0].mxu0
      %471 = vmatprep.mubr.f32.mxu0 0.0
      %472 = vmatmul.mubr.f32.gmra.mrb[0].mxu0 %v338
      %v473 = vpop.f32.mrb[0].mxu0
      %v474 = vadd.f32 %v301, %v473
      %v475 = vpop.f32.mrb[0].mxu0
      %476 = vmatprep.mubr.f32.mxu0 0.0
      %477 = vmatmul.mubr.f32.gmra.mrb[0].mxu0 %v341
      %v478 = vpop.f32.mrb[0].mxu0
      %v479 = vadd.f32 %v301, %v478
      %v480 = vpop.f32.mrb[0].mxu0
      %481 = vmatprep.mubr.f32.mxu0 0.0
      %482 = vmatmul.mubr.f32.gmra.mrb[0].mxu0 %v344
      %v483 = vpop.f32.mrb[0].mxu0
      %v484 = vadd.f32 %v301, %v483
      %v485 = vpop.f32.mrb[0].mxu0
      %486 = vmatprep.mubr.f32.mxu0 0.0
      %487 = vmatmul.mubr.f32.gmra.mrb[0].mxu0 %v347
      %v488 = vpop.f32.mrb[0].mxu0
      %v489 = vadd.f32 %v301, %v488
      %v490 = vpop.f32.mrb[0].mxu0
      %491 = vmatprep.mubr.f32.mxu0 0.0
      %492 = vmatmul.mubr.f32.gmra.mrb[0].mxu0 %v350
      %v493 = vpop.f32.mrb[0].mxu0
      %v494 = vadd.f32 %v301, %v493
      %v495 = vpop.f32.mrb[0].mxu0
      %496 = vdwg.mxu0
      %v497 = vmax.f32 %v419, 0.0
      %v498 = vmax.f32 %v424, 0.0
      %v499 = vmax.f32 %v429, 0.0
      %v500 = vmax.f32 %v434, 0.0
      %v501 = vmax.f32 %v439, 0.0
      %v502 = vmax.f32 %v444, 0.0
      %v503 = vmax.f32 %v449, 0.0
      %v504 = vmax.f32 %v454, 0.0
      %v505 = vmax.f32 %v459, 0.0
      %v506 = vmax.f32 %v464, 0.0
      %v507 = vmax.f32 %v469, 0.0
      %v508 = vmax.f32 %v474, 0.0
      %v509 = vmax.f32 %v479, 0.0
      %v510 = vmax.f32 %v484, 0.0
      %v511 = vmax.f32 %v489, 0.0
      %v512 = vmax.f32 %v494, 0.0
      %v513 = vld [vmem:[%s3] sm:$0xff]
      %v514 = vld [vmem:[%s3 + $0x8] sm:$0xff]
      %v515 = vld [vmem:[%s3 + $0x10] sm:$0xff]
      %v516 = vld [vmem:[%s3 + $0x18] sm:$0xff]
      %v517 = vld [vmem:[%s3 + $0x20] sm:$0xff]
      %v518 = vld [vmem:[%s3 + $0x28] sm:$0xff]
      %v519 = vld [vmem:[%s3 + $0x30] sm:$0xff]
      %v520 = vld [vmem:[%s3 + $0x38] sm:$0xff]
      %v521 = vld [vmem:[%s4] sm:$0x1]
      %v523 = vlaneseq
      %v524 = vshrl.u32 %v523, 7
      %v525 = vsub.s32 0, %v524
      %v526 = vrot.slane %v521, %v525
      %vm528 = vcmask 523264
      %v530 = vsel %vm528, %v497, 0
      %v533 = vsel %vm528, %v498, 0
      %v536 = vsel %vm528, %v499, 0
      %v539 = vsel %vm528, %v500, 0
      %v542 = vsel %vm528, %v501, 0
      %v545 = vsel %vm528, %v502, 0
      %v548 = vsel %vm528, %v503, 0
      %v551 = vsel %vm528, %v504, 0
      %v554 = vsel %vm528, %v505, 0
      %v557 = vsel %vm528, %v506, 0
      %v560 = vsel %vm528, %v507, 0
      %v563 = vsel %vm528, %v508, 0
      %v566 = vsel %vm528, %v509, 0
      %v569 = vsel %vm528, %v510, 0
      %v572 = vsel %vm528, %v511, 0
      %v575 = vsel %vm528, %v512, 0
      %577 = vmatprep.subr.mxu0 0.0
      %578 = vmatpush1.msra.mxu0 %v513
      %579 = vmatprep.subr.mxu0 0.0
      %580 = vmatpush1.msra.mxu0 %v514
      %581 = vmatprep.subr.mxu0 0.0
      %582 = vmatpush1.msra.mxu0 %v515
      %583 = vmatprep.subr.mxu0 0.0
      %584 = vmatpush1.msra.mxu0 %v516
      %585 = vmatprep.subr.mxu0 0.0
      %586 = vmatpush1.msra.mxu0 %v517
      %587 = vmatprep.subr.mxu0 0.0
      %588 = vmatpush1.msra.mxu0 %v518
      %589 = vmatprep.subr.mxu0 0.0
      %590 = vmatpush1.msra.mxu0 %v519
      %591 = vmatprep.subr.mxu0 0.0
      %592 = vmatpush1.msra.mxu0 %v520
      %593 = vmatprep.subr.mxu0 0.0
      %594 = vmatpush1.msra.mxu0 0.0
      %595 = vmatprep.subr.mxu0 0.0
      %596 = vmatpush1.msra.mxu0 0.0
      %597 = vmatprep.subr.mxu0 0.0
      %598 = vmatpush1.msra.mxu0 0.0
      %599 = vmatprep.subr.mxu0 0.0
      %600 = vmatpush1.msra.mxu0 0.0
      %601 = vmatprep.subr.mxu0 0.0
      %602 = vmatpush1.msra.mxu0 0.0
      %603 = vmatprep.subr.mxu0 0.0
      %604 = vmatpush1.msra.mxu0 0.0
      %605 = vmatprep.subr.mxu0 0.0
      %606 = vmatpush1.msra.mxu0 0.0
      %607 = vmatprep.subr.mxu0 0.0
      %608 = vmatpush1.msra.mxu0 0.0
      %609 = vmatprep.subr.mxu0 0.0
      %610 = vmatpush1.msra.mxu0 0.0
      %611 = vmatprep.subr.mxu0 0.0
      %612 = vmatpush1.msra.mxu0 0.0
      %613 = vmatprep.subr.mxu0 0.0
      %614 = vmatpush1.msra.mxu0 0.0
      %615 = vmatprep.subr.mxu0 0.0
      %616 = vmatpush1.msra.mxu0 0.0
      %617 = vmatprep.subr.mxu0 0.0
      %618 = vmatpush1.msra.mxu0 0.0
      %619 = vmatprep.subr.mxu0 0.0
      %620 = vmatpush1.msra.mxu0 0.0
      %621 = vmatprep.subr.mxu0 0.0
      %622 = vmatpush1.msra.mxu0 0.0
      %623 = vmatprep.subr.mxu0 0.0
      %624 = vmatpush1.msra.mxu0 0.0
      %625 = vmatprep.subr.mxu0 0.0
      %626 = vmatpush1.msra.mxu0 0.0
      %627 = vmatprep.subr.mxu0 0.0
      %628 = vmatpush1.msra.mxu0 0.0
      %629 = vmatprep.subr.mxu0 0.0
      %630 = vmatpush1.msra.mxu0 0.0
      %631 = vmatprep.subr.mxu0 0.0
      %632 = vmatpush1.msra.mxu0 0.0
      %633 = vmatprep.subr.mxu0 0.0
      %634 = vmatpush1.msra.mxu0 0.0
      %635 = vmatprep.subr.mxu0 0.0
      %636 = vmatpush1.msra.mxu0 0.0
      %637 = vmatprep.subr.mxu0 0.0
      %638 = vmatpush1.msra.mxu0 0.0
      %639 = vmatprep.subr.mxu0 0.0
      %640 = vmatpush1.msra.mxu0 0.0
      %641 = vmatprep.mubr.f32.mxu0 0.0
      %642 = vmatmul.mubr.f32.gmra.mrb[0].mxu0 %v530
      %v643 = vpop.f32.mrb[0].mxu0
      %v644 = vadd.f32 %v526, %v643
      %v645 = vpop.f32.mrb[0].mxu0
      %646 = vmatprep.mubr.f32.mxu0 0.0
      %647 = vmatmul.mubr.f32.gmra.mrb[0].mxu0 %v533
      %v648 = vpop.f32.mrb[0].mxu0
      %v649 = vadd.f32 %v526, %v648
      %v650 = vpop.f32.mrb[0].mxu0
      %651 = vmatprep.mubr.f32.mxu0 0.0
      %652 = vmatmul.mubr.f32.gmra.mrb[0].mxu0 %v536
      %v653 = vpop.f32.mrb[0].mxu0
      %v654 = vadd.f32 %v526, %v653
      %v655 = vpop.f32.mrb[0].mxu0
      %656 = vmatprep.mubr.f32.mxu0 0.0
      %657 = vmatmul.mubr.f32.gmra.mrb[0].mxu0 %v539
      %v658 = vpop.f32.mrb[0].mxu0
      %v659 = vadd.f32 %v526, %v658
      %v660 = vpop.f32.mrb[0].mxu0
      %661 = vmatprep.mubr.f32.mxu0 0.0
      %662 = vmatmul.mubr.f32.gmra.mrb[0].mxu0 %v542
      %v663 = vpop.f32.mrb[0].mxu0
      %v664 = vadd.f32 %v526, %v663
      %v665 = vpop.f32.mrb[0].mxu0
      %666 = vmatprep.mubr.f32.mxu0 0.0
      %667 = vmatmul.mubr.f32.gmra.mrb[0].mxu0 %v545
      %v668 = vpop.f32.mrb[0].mxu0
      %v669 = vadd.f32 %v526, %v668
      %v670 = vpop.f32.mrb[0].mxu0
      %671 = vmatprep.mubr.f32.mxu0 0.0
      %672 = vmatmul.mubr.f32.gmra.mrb[0].mxu0 %v548
      %v673 = vpop.f32.mrb[0].mxu0
      %v674 = vadd.f32 %v526, %v673
      %v675 = vpop.f32.mrb[0].mxu0
      %676 = vmatprep.mubr.f32.mxu0 0.0
      %677 = vmatmul.mubr.f32.gmra.mrb[0].mxu0 %v551
      %v678 = vpop.f32.mrb[0].mxu0
      %v679 = vadd.f32 %v526, %v678
      %v680 = vpop.f32.mrb[0].mxu0
      %681 = vmatprep.mubr.f32.mxu0 0.0
      %682 = vmatmul.mubr.f32.gmra.mrb[0].mxu0 %v554
      %v683 = vpop.f32.mrb[0].mxu0
      %v684 = vadd.f32 %v526, %v683
      %v685 = vpop.f32.mrb[0].mxu0
      %686 = vmatprep.mubr.f32.mxu0 0.0
      %687 = vmatmul.mubr.f32.gmra.mrb[0].mxu0 %v557
      %v688 = vpop.f32.mrb[0].mxu0
      %v689 = vadd.f32 %v526, %v688
      %v690 = vpop.f32.mrb[0].mxu0
      %691 = vmatprep.mubr.f32.mxu0 0.0
      %692 = vmatmul.mubr.f32.gmra.mrb[0].mxu0 %v560
      %v693 = vpop.f32.mrb[0].mxu0
      %v694 = vadd.f32 %v526, %v693
      %v695 = vpop.f32.mrb[0].mxu0
      %696 = vmatprep.mubr.f32.mxu0 0.0
      %697 = vmatmul.mubr.f32.gmra.mrb[0].mxu0 %v563
      %v698 = vpop.f32.mrb[0].mxu0
      %v699 = vadd.f32 %v526, %v698
      %v700 = vpop.f32.mrb[0].mxu0
      %701 = vmatprep.mubr.f32.mxu0 0.0
      %702 = vmatmul.mubr.f32.gmra.mrb[0].mxu0 %v566
      %v703 = vpop.f32.mrb[0].mxu0
      %v704 = vadd.f32 %v526, %v703
      %v705 = vpop.f32.mrb[0].mxu0
      %706 = vmatprep.mubr.f32.mxu0 0.0
      %707 = vmatmul.mubr.f32.gmra.mrb[0].mxu0 %v569
      %v708 = vpop.f32.mrb[0].mxu0
      %v709 = vadd.f32 %v526, %v708
      %v710 = vpop.f32.mrb[0].mxu0
      %711 = vmatprep.mubr.f32.mxu0 0.0
      %712 = vmatmul.mubr.f32.gmra.mrb[0].mxu0 %v572
      %v713 = vpop.f32.mrb[0].mxu0
      %v714 = vadd.f32 %v526, %v713
      %v715 = vpop.f32.mrb[0].mxu0
      %716 = vmatprep.mubr.f32.mxu0 0.0
      %717 = vmatmul.mubr.f32.gmra.mrb[0].mxu0 %v575
      %v718 = vpop.f32.mrb[0].mxu0
      %v719 = vadd.f32 %v526, %v718
      %v720 = vpop.f32.mrb[0].mxu0
      %721 = vdwg.mxu0
      %v722 = vmax.f32 %v644, 0.0
      %v723 = vmax.f32 %v649, 0.0
      %v724 = vmax.f32 %v654, 0.0
      %v725 = vmax.f32 %v659, 0.0
      %v726 = vmax.f32 %v664, 0.0
      %v727 = vmax.f32 %v669, 0.0
      %v728 = vmax.f32 %v674, 0.0
      %v729 = vmax.f32 %v679, 0.0
      %v730 = vmax.f32 %v684, 0.0
      %v731 = vmax.f32 %v689, 0.0
      %v732 = vmax.f32 %v694, 0.0
      %v733 = vmax.f32 %v699, 0.0
      %v734 = vmax.f32 %v704, 0.0
      %v735 = vmax.f32 %v709, 0.0
      %v736 = vmax.f32 %v714, 0.0
      %v737 = vmax.f32 %v719, 0.0
      %v738 = vld [vmem:[%s5] sm:$0xff]
      %v739 = vld [vmem:[%s5 + $0x8] sm:$0xff]
      %v740 = vld [vmem:[%s5 + $0x10] sm:$0xff]
      %v741 = vld [vmem:[%s5 + $0x18] sm:$0xff]
      %v742 = vld [vmem:[%s5 + $0x20] sm:$0xff]
      %v743 = vld [vmem:[%s5 + $0x28] sm:$0xff]
      %v744 = vld [vmem:[%s5 + $0x30] sm:$0xff]
      %v745 = vld [vmem:[%s5 + $0x38] sm:$0xff]
      %v746 = vld [vmem:[%s6] sm:$0x1]
      %v748 = vlaneseq
      %v749 = vshrl.u32 %v748, 7
      %v750 = vsub.s32 0, %v749
      %v751 = vrot.slane %v746, %v750
      %v754 = vsel %vm528, %v722, 0
      %v757 = vsel %vm528, %v723, 0
      %v760 = vsel %vm528, %v724, 0
      %v763 = vsel %vm528, %v725, 0
      %v766 = vsel %vm528, %v726, 0
      %v769 = vsel %vm528, %v727, 0
      %v772 = vsel %vm528, %v728, 0
      %v775 = vsel %vm528, %v729, 0
      %v778 = vsel %vm528, %v730, 0
      %v781 = vsel %vm528, %v731, 0
      %v784 = vsel %vm528, %v732, 0
      %v787 = vsel %vm528, %v733, 0
      %v790 = vsel %vm528, %v734, 0
      %v793 = vsel %vm528, %v735, 0
      %v796 = vsel %vm528, %v736, 0
      %v799 = vsel %vm528, %v737, 0
      %801 = vmatprep.subr.mxu0 0.0
      %802 = vmatpush1.msra.mxu0 %v738
      %803 = vmatprep.subr.mxu0 0.0
      %804 = vmatpush1.msra.mxu0 %v739
      %805 = vmatprep.subr.mxu0 0.0
      %806 = vmatpush1.msra.mxu0 %v740
      %807 = vmatprep.subr.mxu0 0.0
      %808 = vmatpush1.msra.mxu0 %v741
      %809 = vmatprep.subr.mxu0 0.0
      %810 = vmatpush1.msra.mxu0 %v742
      %811 = vmatprep.subr.mxu0 0.0
      %812 = vmatpush1.msra.mxu0 %v743
      %813 = vmatprep.subr.mxu0 0.0
      %814 = vmatpush1.msra.mxu0 %v744
      %815 = vmatprep.subr.mxu0 0.0
      %816 = vmatpush1.msra.mxu0 %v745
      %817 = vmatprep.subr.mxu0 0.0
      %818 = vmatpush1.msra.mxu0 0.0
      %819 = vmatprep.subr.mxu0 0.0
      %820 = vmatpush1.msra.mxu0 0.0
      %821 = vmatprep.subr.mxu0 0.0
      %822 = vmatpush1.msra.mxu0 0.0
      %823 = vmatprep.subr.mxu0 0.0
      %824 = vmatpush1.msra.mxu0 0.0
      %825 = vmatprep.subr.mxu0 0.0
      %826 = vmatpush1.msra.mxu0 0.0
      %827 = vmatprep.subr.mxu0 0.0
      %828 = vmatpush1.msra.mxu0 0.0
      %829 = vmatprep.subr.mxu0 0.0
      %830 = vmatpush1.msra.mxu0 0.0
      %831 = vmatprep.subr.mxu0 0.0
      %832 = vmatpush1.msra.mxu0 0.0
      %833 = vmatprep.subr.mxu0 0.0
      %834 = vmatpush1.msra.mxu0 0.0
      %835 = vmatprep.subr.mxu0 0.0
      %836 = vmatpush1.msra.mxu0 0.0
      %837 = vmatprep.subr.mxu0 0.0
      %838 = vmatpush1.msra.mxu0 0.0
      %839 = vmatprep.subr.mxu0 0.0
      %840 = vmatpush1.msra.mxu0 0.0
      %841 = vmatprep.subr.mxu0 0.0
      %842 = vmatpush1.msra.mxu0 0.0
      %843 = vmatprep.subr.mxu0 0.0
      %844 = vmatpush1.msra.mxu0 0.0
      %845 = vmatprep.subr.mxu0 0.0
      %846 = vmatpush1.msra.mxu0 0.0
      %847 = vmatprep.subr.mxu0 0.0
      %848 = vmatpush1.msra.mxu0 0.0
      %849 = vmatprep.subr.mxu0 0.0
      %850 = vmatpush1.msra.mxu0 0.0
      %851 = vmatprep.subr.mxu0 0.0
      %852 = vmatpush1.msra.mxu0 0.0
      %853 = vmatprep.subr.mxu0 0.0
      %854 = vmatpush1.msra.mxu0 0.0
      %855 = vmatprep.subr.mxu0 0.0
      %856 = vmatpush1.msra.mxu0 0.0
      %857 = vmatprep.subr.mxu0 0.0
      %858 = vmatpush1.msra.mxu0 0.0
      %859 = vmatprep.subr.mxu0 0.0
      %860 = vmatpush1.msra.mxu0 0.0
      %861 = vmatprep.subr.mxu0 0.0
      %862 = vmatpush1.msra.mxu0 0.0
      %863 = vmatprep.subr.mxu0 0.0
      %864 = vmatpush1.msra.mxu0 0.0
      %865 = vmatprep.mubr.f32.mxu0 0.0
      %866 = vmatmul.mubr.f32.gmra.mrb[0].mxu0 %v754
      %v867 = vpop.f32.mrb[0].mxu0
      %v868 = vadd.f32 %v751, %v867
      %v869 = vpop.f32.mrb[0].mxu0
      %870 = vmatprep.mubr.f32.mxu0 0.0
      %871 = vmatmul.mubr.f32.gmra.mrb[0].mxu0 %v757
      %v872 = vpop.f32.mrb[0].mxu0
      %v873 = vadd.f32 %v751, %v872
      %v874 = vpop.f32.mrb[0].mxu0
      %875 = vmatprep.mubr.f32.mxu0 0.0
      %876 = vmatmul.mubr.f32.gmra.mrb[0].mxu0 %v760
      %v877 = vpop.f32.mrb[0].mxu0
      %v878 = vadd.f32 %v751, %v877
      %v879 = vpop.f32.mrb[0].mxu0
      %880 = vmatprep.mubr.f32.mxu0 0.0
      %881 = vmatmul.mubr.f32.gmra.mrb[0].mxu0 %v763
      %v882 = vpop.f32.mrb[0].mxu0
      %v883 = vadd.f32 %v751, %v882
      %v884 = vpop.f32.mrb[0].mxu0
      %885 = vmatprep.mubr.f32.mxu0 0.0
      %886 = vmatmul.mubr.f32.gmra.mrb[0].mxu0 %v766
      %v887 = vpop.f32.mrb[0].mxu0
      %v888 = vadd.f32 %v751, %v887
      %v889 = vpop.f32.mrb[0].mxu0
      %890 = vmatprep.mubr.f32.mxu0 0.0
      %891 = vmatmul.mubr.f32.gmra.mrb[0].mxu0 %v769
      %v892 = vpop.f32.mrb[0].mxu0
      %v893 = vadd.f32 %v751, %v892
      %v894 = vpop.f32.mrb[0].mxu0
      %895 = vmatprep.mubr.f32.mxu0 0.0
      %896 = vmatmul.mubr.f32.gmra.mrb[0].mxu0 %v772
      %v897 = vpop.f32.mrb[0].mxu0
      %v898 = vadd.f32 %v751, %v897
      %v899 = vpop.f32.mrb[0].mxu0
      %900 = vmatprep.mubr.f32.mxu0 0.0
      %901 = vmatmul.mubr.f32.gmra.mrb[0].mxu0 %v775
      %v902 = vpop.f32.mrb[0].mxu0
      %v903 = vadd.f32 %v751, %v902
      %v904 = vpop.f32.mrb[0].mxu0
      %905 = vmatprep.mubr.f32.mxu0 0.0
      %906 = vmatmul.mubr.f32.gmra.mrb[0].mxu0 %v778
      %v907 = vpop.f32.mrb[0].mxu0
      %v908 = vadd.f32 %v751, %v907
      %v909 = vpop.f32.mrb[0].mxu0
      %910 = vmatprep.mubr.f32.mxu0 0.0
      %911 = vmatmul.mubr.f32.gmra.mrb[0].mxu0 %v781
      %v912 = vpop.f32.mrb[0].mxu0
      %v913 = vadd.f32 %v751, %v912
      %v914 = vpop.f32.mrb[0].mxu0
      %915 = vmatprep.mubr.f32.mxu0 0.0
      %916 = vmatmul.mubr.f32.gmra.mrb[0].mxu0 %v784
      %v917 = vpop.f32.mrb[0].mxu0
      %v918 = vadd.f32 %v751, %v917
      %v919 = vpop.f32.mrb[0].mxu0
      %920 = vmatprep.mubr.f32.mxu0 0.0
      %921 = vmatmul.mubr.f32.gmra.mrb[0].mxu0 %v787
      %v922 = vpop.f32.mrb[0].mxu0
      %v923 = vadd.f32 %v751, %v922
      %v924 = vpop.f32.mrb[0].mxu0
      %925 = vmatprep.mubr.f32.mxu0 0.0
      %926 = vmatmul.mubr.f32.gmra.mrb[0].mxu0 %v790
      %v927 = vpop.f32.mrb[0].mxu0
      %v928 = vadd.f32 %v751, %v927
      %v929 = vpop.f32.mrb[0].mxu0
      %930 = vmatprep.mubr.f32.mxu0 0.0
      %931 = vmatmul.mubr.f32.gmra.mrb[0].mxu0 %v793
      %v932 = vpop.f32.mrb[0].mxu0
      %v933 = vadd.f32 %v751, %v932
      %v934 = vpop.f32.mrb[0].mxu0
      %935 = vmatprep.mubr.f32.mxu0 0.0
      %936 = vmatmul.mubr.f32.gmra.mrb[0].mxu0 %v796
      %v937 = vpop.f32.mrb[0].mxu0
      %v938 = vadd.f32 %v751, %v937
      %v939 = vpop.f32.mrb[0].mxu0
      %940 = vmatprep.mubr.f32.mxu0 0.0
      %941 = vmatmul.mubr.f32.gmra.mrb[0].mxu0 %v799
      %v942 = vpop.f32.mrb[0].mxu0
      %v943 = vadd.f32 %v751, %v942
      %v944 = vpop.f32.mrb[0].mxu0
      %945 = vdwg.mxu0
      %v946 = vmax.f32 %v868, 0.0
      %v947 = vmax.f32 %v873, 0.0
      %v948 = vmax.f32 %v878, 0.0
      %v949 = vmax.f32 %v883, 0.0
      %v950 = vmax.f32 %v888, 0.0
      %v951 = vmax.f32 %v893, 0.0
      %v952 = vmax.f32 %v898, 0.0
      %v953 = vmax.f32 %v903, 0.0
      %v954 = vmax.f32 %v908, 0.0
      %v955 = vmax.f32 %v913, 0.0
      %v956 = vmax.f32 %v918, 0.0
      %v957 = vmax.f32 %v923, 0.0
      %v958 = vmax.f32 %v928, 0.0
      %v959 = vmax.f32 %v933, 0.0
      %v960 = vmax.f32 %v938, 0.0
      %v961 = vmax.f32 %v943, 0.0
      %v962 = vrot.slane %v946, 4
      %v963 = vadd.f32 %v946, %v962
      %v964 = vrot.slane %v963, 2
      %v965 = vadd.f32 %v963, %v964
      %v966 = vrot.slane %v965, 1
      %v967 = vadd.f32 %v965, %v966
      %v968 = vrot.slane %v948, 4
      %v969 = vadd.f32 %v948, %v968
      %v970 = vrot.slane %v969, 2
      %v971 = vadd.f32 %v969, %v970
      %v972 = vrot.slane %v971, 1
      %v973 = vadd.f32 %v971, %v972
      %v974 = vrot.slane %v950, 4
      %v975 = vadd.f32 %v950, %v974
      %v976 = vrot.slane %v975, 2
      %v977 = vadd.f32 %v975, %v976
      %v978 = vrot.slane %v977, 1
      %v979 = vadd.f32 %v977, %v978
      %v980 = vrot.slane %v952, 4
      %v981 = vadd.f32 %v952, %v980
      %v982 = vrot.slane %v981, 2
      %v983 = vadd.f32 %v981, %v982
      %v984 = vrot.slane %v983, 1
      %v985 = vadd.f32 %v983, %v984
      %v986 = vrot.slane %v954, 4
      %v987 = vadd.f32 %v954, %v986
      %v988 = vrot.slane %v987, 2
      %v989 = vadd.f32 %v987, %v988
      %v990 = vrot.slane %v989, 1
      %v991 = vadd.f32 %v989, %v990
      %v992 = vrot.slane %v956, 4
      %v993 = vadd.f32 %v956, %v992
      %v994 = vrot.slane %v993, 2
      %v995 = vadd.f32 %v993, %v994
      %v996 = vrot.slane %v995, 1
      %v997 = vadd.f32 %v995, %v996
      %v998 = vrot.slane %v958, 4
      %v999 = vadd.f32 %v958, %v998
      %v1000 = vrot.slane %v999, 2
      %v1001 = vadd.f32 %v999, %v1000
      %v1002 = vrot.slane %v1001, 1
      %v1003 = vadd.f32 %v1001, %v1002
      %v1004 = vrot.slane %v960, 4
      %v1005 = vadd.f32 %v960, %v1004
      %v1006 = vrot.slane %v1005, 2
      %v1007 = vadd.f32 %v1005, %v1006
      %v1008 = vrot.slane %v1007, 1
      %v1009 = vadd.f32 %v1007, %v1008
      %v1010 = vrot.slane %v947, 4
      %v1011 = vadd.f32 %v947, %v1010
      %v1012 = vrot.slane %v1011, 2
      %v1013 = vadd.f32 %v1011, %v1012
      %v1014 = vrot.slane %v1013, 1
      %v1015 = vadd.f32 %v1013, %v1014
      %v1016 = vrot.slane %v949, 4
      %v1017 = vadd.f32 %v949, %v1016
      %v1018 = vrot.slane %v1017, 2
      %v1019 = vadd.f32 %v1017, %v1018
      %v1020 = vrot.slane %v1019, 1
      %v1021 = vadd.f32 %v1019, %v1020
      %v1022 = vrot.slane %v951, 4
      %v1023 = vadd.f32 %v951, %v1022
      %v1024 = vrot.slane %v1023, 2
      %v1025 = vadd.f32 %v1023, %v1024
      %v1026 = vrot.slane %v1025, 1
      %v1027 = vadd.f32 %v1025, %v1026
      %v1028 = vrot.slane %v953, 4
      %v1029 = vadd.f32 %v953, %v1028
      %v1030 = vrot.slane %v1029, 2
      %v1031 = vadd.f32 %v1029, %v1030
      %v1032 = vrot.slane %v1031, 1
      %v1033 = vadd.f32 %v1031, %v1032
      %v1034 = vrot.slane %v955, 4
      %v1035 = vadd.f32 %v955, %v1034
      %v1036 = vrot.slane %v1035, 2
      %v1037 = vadd.f32 %v1035, %v1036
      %v1038 = vrot.slane %v1037, 1
      %v1039 = vadd.f32 %v1037, %v1038
      %v1040 = vrot.slane %v957, 4
      %v1041 = vadd.f32 %v957, %v1040
      %v1042 = vrot.slane %v1041, 2
      %v1043 = vadd.f32 %v1041, %v1042
      %v1044 = vrot.slane %v1043, 1
      %v1045 = vadd.f32 %v1043, %v1044
      %v1046 = vrot.slane %v959, 4
      %v1047 = vadd.f32 %v959, %v1046
      %v1048 = vrot.slane %v1047, 2
      %v1049 = vadd.f32 %v1047, %v1048
      %v1050 = vrot.slane %v1049, 1
      %v1051 = vadd.f32 %v1049, %v1050
      %v1052 = vrot.slane %v961, 4
      %v1053 = vadd.f32 %v961, %v1052
      %v1054 = vrot.slane %v1053, 2
      %v1055 = vadd.f32 %v1053, %v1054
      %v1056 = vrot.slane %v1055, 1
      %v1057 = vadd.f32 %v1055, %v1056
      %v1058 = vlaneseq
      %v1059 = vand.u32 %v1058, 127
      %vm1060 = vcmp.lt.s32.totalorder %v1059, 64
      %vm1069 = vcmask 1041409
      %v1070 = vsel %vm1069, %v973, %v967
      %vm1071 = vcmask 1042434
      %v1072 = vsel %vm1071, %v979, %v1070
      %vm1073 = vcmask 1043459
      %v1074 = vsel %vm1073, %v985, %v1072
      %vm1075 = vcmask 1044484
      %v1076 = vsel %vm1075, %v991, %v1074
      %vm1077 = vcmask 1045509
      %v1078 = vsel %vm1077, %v997, %v1076
      %vm1079 = vcmask 1046534
      %v1080 = vsel %vm1079, %v1003, %v1078
      %vm1081 = vcmask 1047559
      %v1082 = vsel %vm1081, %v1009, %v1080
      %v1092 = vsel %vm1069, %v1021, %v1015
      %v1093 = vsel %vm1071, %v1027, %v1092
      %v1094 = vsel %vm1073, %v1033, %v1093
      %v1095 = vsel %vm1075, %v1039, %v1094
      %v1096 = vsel %vm1077, %v1045, %v1095
      %v1097 = vsel %vm1079, %v1051, %v1096
      %v1098 = vsel %vm1081, %v1057, %v1097
      %v1100 = vsel %vm1060, %v1082, %v1098
      %1101 = vst [vmem:[%s278] sm:$0xff] %v1100
      %p1102 = scmp.lt.s32.totalorder %s18, 1
      %s1103 = scalar_select %p1102, %s18, 1
      %s1104 = smul.addr %s1103, 8
      %s1105 = scalar_lea.vmem %s7, %s1104
      // Predicated region
      $region49: #{feature_aggregation_pallas.1} parent=47 // pred_check
        %p1106 = pneg %p188
      $region50: #{feature_aggregation_pallas.1} parent=47 // pred_check_branch
        %1108 = sbr.rel (%p1106) target = $region52
      $region51: #{feature_aggregation_pallas.1} parent=47 // pred_region
        _
      $region52: #{feature_aggregation_pallas.1} parent=47 // pred_fallthru
        _
    $region48: #{feature_aggregation_pallas.1} parent=5 // pred_fallthru
      _
    %p1109 = scmp.le.s32.totalorder 2, %s13
    // Predicated region
    $region53: #{feature_aggregation_pallas.1} parent=5 // pred_check
      %p1110 = pneg %p1109
    $region54: #{feature_aggregation_pallas.1} parent=5 // pred_check_branch
      %1112 = sbr.rel (%p1110) target = $region56
    $region55: #{feature_aggregation_pallas.1} parent=5 // pred_region
      %s1113 = ssub.s32 %s13, 2
      // Predicated region
      $region57: #{feature_aggregation_pallas.1} parent=55 // pred_check
        %p1114 = pneg %p194
      $region58: #{feature_aggregation_pallas.1} parent=55 // pred_check_branch
        %1116 = sbr.rel (%p1114) target = $region60
      $region59: #{feature_aggregation_pallas.1} parent=55 // pred_region
        %p1117 = scmp.lt.s32.totalorder %s19, 1
        %s1118 = scalar_select %p1117, %s19, 1
        %s1119 = smul.addr %s1118, 8
        %s1120 = scalar_lea.vmem %s7, %s1119
      $region60: #{feature_aggregation_pallas.1} parent=55 // pred_fallthru
        _
    $region56: #{feature_aggregation_pallas.1} parent=5 // pred_fallthru
      _
  $region6: #{feature_aggregation_pallas.1} parent=0 // loop_footer
    %s17 = sadd.s32 1, %s13
  $region7: #{feature_aggregation_pallas.1} parent=0 // loop_footer_branch
    %12 = sbr.rel target = $region3
  $region8: #{feature_aggregation_pallas.1} parent=0 // loop_exit
    _

</llo_original>
